<compile_context>
chip_gen: v7x
topology: tpu7x:2x2x1
jax: 0.10.0
libtpu: 0.0.40
codegen_flags: <defaults>
</compile_context>

<pallas_src>
import functools

import jax
import jax.numpy as jnp
from jax import lax
from jax.experimental import pallas as pl
from jax.experimental.pallas import tpu as pltpu


def _nknn_kernel(q_ref, k_ref, v_ref, o_ref, *, k, inv_temp, neg_inv_sqrt_dim,
                 use_bf16_mxu, approx_recip):
    # q_ref: [bb, T, D]   k_ref: [N, D]   v_ref: [N, F]   o_ref: [bb, T, k*F]
    bb, t, d = q_ref.shape
    n, f = v_ref.shape

    # Fold the -1/sqrt(dim) similarity scale into q once (O(bb*T*D)) instead of
    # negating + dividing the O(bb*T*N) similarity matrix.
    q = q_ref[...].astype(jnp.float32) * neg_inv_sqrt_dim           # [bb, T, D]
    keys = k_ref[...]
    vals = v_ref[...]
    mxu_dtype = jnp.bfloat16 if use_bf16_mxu else jnp.float32

    # Similarity in [rows = bb*T, lanes = N]: s[b*T+t, n] = <q_scaled[b,t], keys[n]>.
    # dot_general contracting (D, D) -> no transpose of either operand.
    # (T is ideally a multiple of 8 so the (bb, T) <-> bb*T reshapes stay
    #  sublane-tile aligned.)
    q2 = q.reshape(bb * t, d).astype(mxu_dtype)
    s = lax.dot_general(q2, keys.astype(mxu_dtype),
                        dimension_numbers=(((1,), (1,)), ((), ())),
                        preferred_element_type=jnp.float32)          # [bb*T, N]
    s = s.reshape(bb, t, n)

    def softmax_over_t(x):                                           # [bb, T, N] f32
        m = jnp.max(x, axis=1, keepdims=True)
        e = jnp.exp(x - m)
        denom = jnp.sum(e, axis=1, keepdims=True)                    # [bb, 1, N]
        return e * pl.reciprocal(denom, approx=approx_recip)

    # Omega recursion (k is a small static int -> unrolled). All math stays in f32.
    alpha = softmax_over_t(s)
    om = softmax_over_t(alpha * inv_temp)
    omegas = [om]
    for _ in range(1, k):
        # Clamp so omega ~ 1 (or slightly > 1 under the approx reciprocal) cannot
        # produce -inf / NaN that poisons the remaining iterations.
        alpha = alpha + jnp.log(jnp.maximum(1.0 - om, 1e-30))
        om = softmax_over_t(alpha * inv_temp)
        omegas.append(om)

    # Fused output contraction: a single MXU call covering all K omegas.
    om_all = jnp.concatenate(omegas, axis=0)                         # [k*bb, T, N]
    lhs = om_all.reshape(k * bb * t, n).astype(mxu_dtype)
    out = jnp.dot(lhs, vals.astype(mxu_dtype),
                  preferred_element_type=jnp.float32)                # [k*bb*T, F]
    out = out.reshape(k, bb, t, f)

    # Lane-pack the K slabs into the (bb, T, K*F) output block; the HBM writeback
    # of the block is one lane-dense DMA (no wrapper transpose needed).
    for i in range(k):
        o_ref[:, :, i * f:(i + 1) * f] = out[i].astype(o_ref.dtype)


def _pick_block_b(B, T, N, D, F, k):
    """Largest divisor of B whose block feeds <=~256 MXU rows and whose per-step
    intermediates stay well inside a conservative VMEM budget."""
    budget_bytes = 24 * 1024 * 1024
    best = 1
    for bb in range(1, B + 1):
        if B % bb:
            continue
        rows_ok = bb * T <= max(256, T)
        inter_bytes = 4 * bb * T * ((k + 6) * N + D + k * F)
        if rows_ok and inter_bytes <= budget_bytes:
            best = bb
    return best


def neural_knn(query, keys, values, *, k, temp, block_b=None,
               use_bf16_mxu=False, approx_recip=False):
    """query [B,T,D], keys [N,D], values [N,F] -> [B,T,K,F] float32."""
    B, T, D = query.shape
    N, Dk = keys.shape
    Nv, F = values.shape
    assert Dk == D and Nv == N
    # TODO(synk): the module's unused `mask` flag and arbitrary leading '...' batch
    # dims (groups sharing keys) are not handled; only the canonical case is.

    bb = block_b if block_b is not None else _pick_block_b(B, T, N, D, F, k)
    assert B % bb == 0, f"block_b={bb} must divide B={B}"
    grid = (B // bb,)

    kernel = functools.partial(
        _nknn_kernel,
        k=int(k),
        inv_temp=1.0 / float(temp),
        neg_inv_sqrt_dim=-1.0 / (float(D) ** 0.5),
        use_bf16_mxu=use_bf16_mxu,
        approx_recip=approx_recip,
    )

    # VMEM budget: double-buffered query/output blocks + resident keys/values
    # + in-flight softmax/omega intermediates.  Cap at 64 MiB (v7x-safe).
    est = 4 * (2 * bb * T * D + 2 * N * (D + F) + 2 * bb * T * k * F
               + (k + 6) * bb * T * N)
    vmem_limit = int(min(max(2 * est, 32 * 1024 * 1024), 64 * 1024 * 1024))

    out_flat = pl.pallas_call(
        kernel,
        out_shape=jax.ShapeDtypeStruct((B, T, k * F), jnp.float32),
        grid=grid,
        in_specs=[
            pl.BlockSpec((bb, T, D), lambda b: (b, 0, 0)),
            # keys/values: constant index maps -> fetched once, kept resident
            # across the (per-core sequential) grid.  For very large N one would
            # single-buffer them or add an 'arbitrary' N-tiling axis (v7x).
            pl.BlockSpec((N, D), lambda b: (0, 0)),
            pl.BlockSpec((N, F), lambda b: (0, 0)),
        ],
        out_specs=pl.BlockSpec((bb, T, k * F), lambda b: (b, 0, 0)),
        compiler_params=pltpu.CompilerParams(
            dimension_semantics=("parallel",),
            vmem_limit_bytes=vmem_limit,
        ),
    )(query, keys, values)

    # Free reshape (no HBM transpose): (B, T, K*F) -> (B, T, K, F).
    return out_flat.reshape(B, T, k, F)


def neural_knn_ref(query, keys, values, k, temp):
    """Pure-JAX reference mirroring the PyTorch module."""
    D = query.shape[-1]
    s = -jnp.einsum("btd,nd->bnt", query, keys) / (D ** 0.5)
    alpha = jax.nn.softmax(s, axis=-1)
    om = jax.nn.softmax(alpha / temp, axis=-1)
    omegas = [om]
    for _ in range(1, k):
        alpha = alpha + jnp.log(1.0 - om)
        om = jax.nn.softmax(alpha / temp, axis=-1)
        omegas.append(om)
    omega = jnp.stack(omegas, axis=-1)                 # [B, N, T, K]
    return jnp.einsum("bntk,nf->btkf", omega, values)


if __name__ == "__main__":
    # Shapes consistent with the module's asserts:
    #   keys.shape[-2] == dim -> N == D; values.shape[-2] == feature -> feature == N
    #   keys.shape[-1] == values.shape[-1] -> D == F
    B, T, D = 2, 8, 32
    N, F = 32, 32
    K, TEMP = 4, 0.5

    root = jax.random.PRNGKey(0)
    kq, kk, kv = jax.random.split(root, 3)
    query = jax.random.normal(kq, (B, T, D), dtype=jnp.float32)
    keys = jax.random.normal(kk, (N, D), dtype=jnp.float32)
    values = jax.random.normal(kv, (N, F), dtype=jnp.float32)

    ref = neural_knn_ref(query, keys, values, K, TEMP)

    # Default (f32 MXU, exact reciprocal) path: tight tolerance.
    out = neural_knn(query, keys, values, k=K, temp=TEMP)
    out = jax.block_until_ready(out)
    assert out.shape == (B, T, K, F), out.shape
    assert jnp.allclose(out, ref, atol=2e-4, rtol=2e-4), "f32 path mismatch vs reference"

    # Fast-math path (bf16 MXU operands + approx EUP reciprocal): smoke check at
    # a loose tolerance (review note: bf16 MXU needs looser tolerance vs f32 ref).
    out_fast = neural_knn(query, keys, values, k=K, temp=TEMP,
                          use_bf16_mxu=True, approx_recip=True)
    out_fast = jax.block_until_ready(out_fast)
    assert out_fast.shape == (B, T, K, F), out_fast.shape
    assert bool(jnp.all(jnp.isfinite(out_fast))), "fast path produced non-finite values"
    assert jnp.allclose(out_fast, ref, atol=2e-1, rtol=2e-1), "fast path grossly off"

    print("KERNEL_OK")
</pallas_src>

<mosaic_0001>
module attributes {stable_mosaic.version = 11 : i64} {
  func.func @_nknn_kernel(%arg0: i32, %arg1: memref<2x8x32xf32, #tpu.memory_space<vmem>>, %arg2: memref<32x32xf32, #tpu.memory_space<vmem>>, %arg3: memref<32x32xf32, #tpu.memory_space<vmem>>, %arg4: memref<2x8x128xf32, #tpu.memory_space<vmem>>) attributes {dimension_semantics = [#tpu.dimension_semantics<parallel>], iteration_bounds = array<i64: 1>, scalar_prefetch = 0 : i64, scratch_operands = 0 : i64, tpu.core_type = #tpu.core_type<tc>, window_params = [{transform_indices = @transform_0, window_bounds = array<i64: 2, 8, 32>}, {pipeline_mode = #tpu.pipeline_mode<synchronous>, transform_indices = @transform_1, window_bounds = array<i64: 32, 32>}, {pipeline_mode = #tpu.pipeline_mode<synchronous>, transform_indices = @transform_2, window_bounds = array<i64: 32, 32>}, {transform_indices = @transform_3, window_bounds = array<i64: 2, 8, 128>}]} {
    %c0 = arith.constant 0 : index
    %c0_0 = arith.constant 0 : index
    %c0_1 = arith.constant 0 : index
    %0 = vector.load %arg1[%c0, %c0_0, %c0_1] : memref<2x8x32xf32, #tpu.memory_space<vmem>>, vector<2x8x32xf32>
    %cst = arith.constant -0.176776692 : f32
    %1 = vector.broadcast %cst : f32 to vector<2x8x32xf32>
    %2 = arith.mulf %0, %1 : vector<2x8x32xf32>
    %c0_2 = arith.constant 0 : index
    %c0_3 = arith.constant 0 : index
    %3 = vector.load %arg2[%c0_2, %c0_3] : memref<32x32xf32, #tpu.memory_space<vmem>>, vector<32x32xf32>
    %c0_4 = arith.constant 0 : index
    %c0_5 = arith.constant 0 : index
    %4 = vector.load %arg3[%c0_4, %c0_5] : memref<32x32xf32, #tpu.memory_space<vmem>>, vector<32x32xf32>
    %5 = vector.shape_cast %2 : vector<2x8x32xf32> to vector<16x32xf32>
    %cst_6 = arith.constant dense<0.000000e+00> : vector<16x32xf32>
    %6 = tpu.matmul %5, %3, %cst_6 {dimension_numbers = #tpu.dot_dimension_numbers<[1], [1], [0], [0], [0, 0, 1, 0], [], []>} : vector<16x32xf32>, vector<32x32xf32>, vector<16x32xf32> -> vector<16x32xf32>
    %7 = vector.shape_cast %6 : vector<16x32xf32> to vector<2x8x32xf32>
    %cst_7 = arith.constant dense<0xFF800000> : vector<2x32xf32>
    %8 = vector.multi_reduction <maximumf>, %7, %cst_7 [1] : vector<2x8x32xf32> to vector<2x32xf32>
    %9 = vector.shape_cast %8 : vector<2x32xf32> to vector<2x1x32xf32>
    %10 = vector.broadcast %9 : vector<2x1x32xf32> to vector<2x8x32xf32>
    %11 = arith.subf %7, %10 : vector<2x8x32xf32>
    %12 = math.exp %11 : vector<2x8x32xf32>
    %cst_8 = arith.constant dense<0.000000e+00> : vector<2x32xf32>
    %13 = vector.multi_reduction <add>, %12, %cst_8 [1] : vector<2x8x32xf32> to vector<2x32xf32>
    %14 = vector.shape_cast %13 : vector<2x32xf32> to vector<2x1x32xf32>
    %15 = tpu.reciprocal %14 : vector<2x1x32xf32> -> vector<2x1x32xf32>
    %16 = vector.broadcast %15 : vector<2x1x32xf32> to vector<2x8x32xf32>
    %17 = arith.mulf %12, %16 : vector<2x8x32xf32>
    %cst_9 = arith.constant 2.000000e+00 : f32
    %18 = vector.broadcast %cst_9 : f32 to vector<2x8x32xf32>
    %19 = arith.mulf %17, %18 : vector<2x8x32xf32>
    %cst_10 = arith.constant dense<0xFF800000> : vector<2x32xf32>
    %20 = vector.multi_reduction <maximumf>, %19, %cst_10 [1] : vector<2x8x32xf32> to vector<2x32xf32>
    %21 = vector.shape_cast %20 : vector<2x32xf32> to vector<2x1x32xf32>
    %22 = vector.broadcast %21 : vector<2x1x32xf32> to vector<2x8x32xf32>
    %23 = arith.subf %19, %22 : vector<2x8x32xf32>
    %24 = math.exp %23 : vector<2x8x32xf32>
    %cst_11 = arith.constant dense<0.000000e+00> : vector<2x32xf32>
    %25 = vector.multi_reduction <add>, %24, %cst_11 [1] : vector<2x8x32xf32> to vector<2x32xf32>
    %26 = vector.shape_cast %25 : vector<2x32xf32> to vector<2x1x32xf32>
    %27 = tpu.reciprocal %26 : vector<2x1x32xf32> -> vector<2x1x32xf32>
    %28 = vector.broadcast %27 : vector<2x1x32xf32> to vector<2x8x32xf32>
    %29 = arith.mulf %24, %28 : vector<2x8x32xf32>
    %cst_12 = arith.constant 1.000000e+00 : f32
    %30 = vector.broadcast %cst_12 : f32 to vector<2x8x32xf32>
    %31 = arith.subf %30, %29 : vector<2x8x32xf32>
    %cst_13 = arith.constant 1.000000e-30 : f32
    %32 = vector.broadcast %cst_13 : f32 to vector<2x8x32xf32>
    %33 = arith.maximumf %31, %32 : vector<2x8x32xf32>
    %34 = math.log %33 : vector<2x8x32xf32>
    %35 = arith.addf %17, %34 : vector<2x8x32xf32>
    %cst_14 = arith.constant 2.000000e+00 : f32
    %36 = vector.broadcast %cst_14 : f32 to vector<2x8x32xf32>
    %37 = arith.mulf %35, %36 : vector<2x8x32xf32>
    %cst_15 = arith.constant dense<0xFF800000> : vector<2x32xf32>
    %38 = vector.multi_reduction <maximumf>, %37, %cst_15 [1] : vector<2x8x32xf32> to vector<2x32xf32>
    %39 = vector.shape_cast %38 : vector<2x32xf32> to vector<2x1x32xf32>
    %40 = vector.broadcast %39 : vector<2x1x32xf32> to vector<2x8x32xf32>
    %41 = arith.subf %37, %40 : vector<2x8x32xf32>
    %42 = math.exp %41 : vector<2x8x32xf32>
    %cst_16 = arith.constant dense<0.000000e+00> : vector<2x32xf32>
    %43 = vector.multi_reduction <add>, %42, %cst_16 [1] : vector<2x8x32xf32> to vector<2x32xf32>
    %44 = vector.shape_cast %43 : vector<2x32xf32> to vector<2x1x32xf32>
    %45 = tpu.reciprocal %44 : vector<2x1x32xf32> -> vector<2x1x32xf32>
    %46 = vector.broadcast %45 : vector<2x1x32xf32> to vector<2x8x32xf32>
    %47 = arith.mulf %42, %46 : vector<2x8x32xf32>
    %cst_17 = arith.constant 1.000000e+00 : f32
    %48 = vector.broadcast %cst_17 : f32 to vector<2x8x32xf32>
    %49 = arith.subf %48, %47 : vector<2x8x32xf32>
    %cst_18 = arith.constant 1.000000e-30 : f32
    %50 = vector.broadcast %cst_18 : f32 to vector<2x8x32xf32>
    %51 = arith.maximumf %49, %50 : vector<2x8x32xf32>
    %52 = math.log %51 : vector<2x8x32xf32>
    %53 = arith.addf %35, %52 : vector<2x8x32xf32>
    %cst_19 = arith.constant 2.000000e+00 : f32
    %54 = vector.broadcast %cst_19 : f32 to vector<2x8x32xf32>
    %55 = arith.mulf %53, %54 : vector<2x8x32xf32>
    %cst_20 = arith.constant dense<0xFF800000> : vector<2x32xf32>
    %56 = vector.multi_reduction <maximumf>, %55, %cst_20 [1] : vector<2x8x32xf32> to vector<2x32xf32>
    %57 = vector.shape_cast %56 : vector<2x32xf32> to vector<2x1x32xf32>
    %58 = vector.broadcast %57 : vector<2x1x32xf32> to vector<2x8x32xf32>
    %59 = arith.subf %55, %58 : vector<2x8x32xf32>
    %60 = math.exp %59 : vector<2x8x32xf32>
    %cst_21 = arith.constant dense<0.000000e+00> : vector<2x32xf32>
    %61 = vector.multi_reduction <add>, %60, %cst_21 [1] : vector<2x8x32xf32> to vector<2x32xf32>
    %62 = vector.shape_cast %61 : vector<2x32xf32> to vector<2x1x32xf32>
    %63 = tpu.reciprocal %62 : vector<2x1x32xf32> -> vector<2x1x32xf32>
    %64 = vector.broadcast %63 : vector<2x1x32xf32> to vector<2x8x32xf32>
    %65 = arith.mulf %60, %64 : vector<2x8x32xf32>
    %cst_22 = arith.constant 1.000000e+00 : f32
    %66 = vector.broadcast %cst_22 : f32 to vector<2x8x32xf32>
    %67 = arith.subf %66, %65 : vector<2x8x32xf32>
    %cst_23 = arith.constant 1.000000e-30 : f32
    %68 = vector.broadcast %cst_23 : f32 to vector<2x8x32xf32>
    %69 = arith.maximumf %67, %68 : vector<2x8x32xf32>
    %70 = math.log %69 : vector<2x8x32xf32>
    %71 = arith.addf %53, %70 : vector<2x8x32xf32>
    %cst_24 = arith.constant 2.000000e+00 : f32
    %72 = vector.broadcast %cst_24 : f32 to vector<2x8x32xf32>
    %73 = arith.mulf %71, %72 : vector<2x8x32xf32>
    %cst_25 = arith.constant dense<0xFF800000> : vector<2x32xf32>
    %74 = vector.multi_reduction <maximumf>, %73, %cst_25 [1] : vector<2x8x32xf32> to vector<2x32xf32>
    %75 = vector.shape_cast %74 : vector<2x32xf32> to vector<2x1x32xf32>
    %76 = vector.broadcast %75 : vector<2x1x32xf32> to vector<2x8x32xf32>
    %77 = arith.subf %73, %76 : vector<2x8x32xf32>
    %78 = math.exp %77 : vector<2x8x32xf32>
    %cst_26 = arith.constant dense<0.000000e+00> : vector<2x32xf32>
    %79 = vector.multi_reduction <add>, %78, %cst_26 [1] : vector<2x8x32xf32> to vector<2x32xf32>
    %80 = vector.shape_cast %79 : vector<2x32xf32> to vector<2x1x32xf32>
    %81 = tpu.reciprocal %80 : vector<2x1x32xf32> -> vector<2x1x32xf32>
    %82 = vector.broadcast %81 : vector<2x1x32xf32> to vector<2x8x32xf32>
    %83 = arith.mulf %78, %82 : vector<2x8x32xf32>
    %84 = tpu.concatenate %29, %47, %65, %83 in 0 : vector<2x8x32xf32>, vector<2x8x32xf32>, vector<2x8x32xf32>, vector<2x8x32xf32> -> vector<8x8x32xf32>
    %85 = vector.shape_cast %84 : vector<8x8x32xf32> to vector<64x32xf32>
    %cst_27 = arith.constant dense<0.000000e+00> : vector<64x32xf32>
    %86 = tpu.matmul %85, %4, %cst_27 {dimension_numbers = #tpu.dot_dimension_numbers<[1], [0], [0], [1], [0, 0, 1, 1], [], []>} : vector<64x32xf32>, vector<32x32xf32>, vector<64x32xf32> -> vector<64x32xf32>
    %87 = vector.shape_cast %86 : vector<64x32xf32> to vector<4x2x8x32xf32>
    %88 = vector.extract_strided_slice %87 {offsets = [0, 0, 0, 0], sizes = [1, 2, 8, 32], strides = [1, 1, 1, 1]} : vector<4x2x8x32xf32> to vector<1x2x8x32xf32>
    %89 = vector.shape_cast %88 : vector<1x2x8x32xf32> to vector<2x8x32xf32>
    %c0_28 = arith.constant 0 : index
    %c0_29 = arith.constant 0 : index
    %c0_30 = arith.constant 0 : index
    %90 = vector.load %arg4[%c0_28, %c0_29, %c0_30] : memref<2x8x128xf32, #tpu.memory_space<vmem>>, vector<2x8x32xf32>
    tpu.vector_store %arg4[%c0_28, %c0_29, %c0_30], %89 {strides = array<i32>} : memref<2x8x128xf32, #tpu.memory_space<vmem>>, vector<2x8x32xf32>,
    %91 = vector.extract_strided_slice %87 {offsets = [1, 0, 0, 0], sizes = [1, 2, 8, 32], strides = [1, 1, 1, 1]} : vector<4x2x8x32xf32> to vector<1x2x8x32xf32>
    %92 = vector.shape_cast %91 : vector<1x2x8x32xf32> to vector<2x8x32xf32>
    %c0_31 = arith.constant 0 : index
    %c0_32 = arith.constant 0 : index
    %c32 = arith.constant 32 : index
    %93 = vector.load %arg4[%c0_31, %c0_32, %c32] : memref<2x8x128xf32, #tpu.memory_space<vmem>>, vector<2x8x32xf32>
    tpu.vector_store %arg4[%c0_31, %c0_32, %c32], %92 {strides = array<i32>} : memref<2x8x128xf32, #tpu.memory_space<vmem>>, vector<2x8x32xf32>,
    %94 = vector.extract_strided_slice %87 {offsets = [2, 0, 0, 0], sizes = [1, 2, 8, 32], strides = [1, 1, 1, 1]} : vector<4x2x8x32xf32> to vector<1x2x8x32xf32>
    %95 = vector.shape_cast %94 : vector<1x2x8x32xf32> to vector<2x8x32xf32>
    %c0_33 = arith.constant 0 : index
    %c0_34 = arith.constant 0 : index
    %c64 = arith.constant 64 : index
    %96 = vector.load %arg4[%c0_33, %c0_34, %c64] : memref<2x8x128xf32, #tpu.memory_space<vmem>>, vector<2x8x32xf32>
    tpu.vector_store %arg4[%c0_33, %c0_34, %c64], %95 {strides = array<i32>} : memref<2x8x128xf32, #tpu.memory_space<vmem>>, vector<2x8x32xf32>,
    %97 = vector.extract_strided_slice %87 {offsets = [3, 0, 0, 0], sizes = [1, 2, 8, 32], strides = [1, 1, 1, 1]} : vector<4x2x8x32xf32> to vector<1x2x8x32xf32>
    %98 = vector.shape_cast %97 : vector<1x2x8x32xf32> to vector<2x8x32xf32>
    %c0_35 = arith.constant 0 : index
    %c0_36 = arith.constant 0 : index
    %c96 = arith.constant 96 : index
    %99 = vector.load %arg4[%c0_35, %c0_36, %c96] : memref<2x8x128xf32, #tpu.memory_space<vmem>>, vector<2x8x32xf32>
    tpu.vector_store %arg4[%c0_35, %c0_36, %c96], %98 {strides = array<i32>} : memref<2x8x128xf32, #tpu.memory_space<vmem>>, vector<2x8x32xf32>,
    return
  }
  func.func @transform_0(%arg0: i32) -> (i32, i32, i32) {
    %c0_i32 = arith.constant 0 : i32
    %c0_i32_0 = arith.constant 0 : i32
    %c0_i32_1 = arith.constant 0 : i32
    return %arg0, %c0_i32, %c0_i32_0 : i32, i32, i32
  }
  func.func @transform_1(%arg0: i32) -> (i32, i32) {
    %c0_i32 = arith.constant 0 : i32
    %c0_i32_0 = arith.constant 0 : i32
    %c0_i32_1 = arith.constant 0 : i32
    return %c0_i32, %c0_i32_0 : i32, i32
  }
  func.func @transform_2(%arg0: i32) -> (i32, i32) {
    %c0_i32 = arith.constant 0 : i32
    %c0_i32_0 = arith.constant 0 : i32
    %c0_i32_1 = arith.constant 0 : i32
    return %c0_i32, %c0_i32_0 : i32, i32
  }
  func.func @transform_3(%arg0: i32) -> (i32, i32, i32) {
    %c0_i32 = arith.constant 0 : i32
    %c0_i32_0 = arith.constant 0 : i32
    %c0_i32_1 = arith.constant 0 : i32
    return %arg0, %c0_i32, %c0_i32_0 : i32, i32, i32
  }
}

</mosaic_0001>

<llo_original>
// kernel: tpu_custom_call.1
$region0: #{tpu_custom_call.1}
  #allocation0 [shape = 'u32[]', space=smem, size = 0x4, offset = 0x4, fixed_abs, tag = 'smem constant byte address 0x4 - core index']
  #allocation1 [shape = 'u32[144,128]{1,0:T(1,128)}', space=vmem, size = 0x12000, scoped, tag = 'internal scratch']
  %s0 = inlined_call_operand.hbm [shape: f32[2,8,32], index: 0, kind: input, shape index: {}]
  %s1 = inlined_call_operand.hbm [shape: f32[32,32], index: 1, kind: input, shape index: {}]
  %s2 = inlined_call_operand.hbm [shape: f32[32,32], index: 2, kind: input, shape index: {}]
  %s3 = inlined_call_operand.hbm [shape: f32[2,8,128], index: 3, kind: output, shape index: {}]
  %s4 = sld [smem:[#allocation0]]
  $region34: #{tpu_custom_call.1} parent=0
    _
  %s6 = ssub.s32 1, %s4
  %s7 = scalar_select 0, %s6, %s4
  $region1: #{tpu_custom_call.1} parent=0
    #allocation2 [shape = 'u8[8192]{0}', space=vmem, size = 0x2000, scoped, tag = 'input window, operand 0, single buffered']
    #allocation3 [shape = 's32[1]{0}', space=sflag, size = 0x4, scoped, tag = 'scoped memory for tpu_custom_call.1']
    #allocation4 [shape = 's32[1]{0}', space=sflag, size = 0x4, scoped, tag = 'scoped memory for tpu_custom_call.1']
    #allocation5 [shape = 'u8[16384]{0}', space=vmem, size = 0x4000, scoped, tag = 'input window, operand 1, single buffered']
    #allocation6 [shape = 's32[1]{0}', space=sflag, size = 0x4, scoped, tag = 'scoped memory for tpu_custom_call.1']
    #allocation7 [shape = 'u8[16384]{0}', space=vmem, size = 0x4000, scoped, tag = 'input window, operand 2, single buffered']
    #allocation8 [shape = 'u8[8192]{0}', space=vmem, size = 0x2000, scoped, tag = 'output window, operand 0, single buffered']
    %8 = vsyncpa [#allocation3], 0
    %9 = vsyncpa [#allocation6], 0
    %10 = vsyncpa [#allocation4], 0
    // Predicated region
    $region2: #{tpu_custom_call.1} parent=1 // pred_check
      _
    $region3: #{tpu_custom_call.1} parent=1 // pred_check_branch
      %12 = sbr.rel (0) target = $region5
    $region4: #{tpu_custom_call.1} parent=1 // pred_region
      %s14 = ssub.s32 256, 256
      %15 = vsyncadd [#allocation3], %s14
      %s16 = sshll.u32 [#allocation2], 4
      %s17 = int_to_ptr.vmem [resolvable:$true] %s16
      %22 = dma.hbm_to_vmem [thread:$0]  %s0, 256, %s17, [#allocation3], 128, 128, 8
    $region5: #{tpu_custom_call.1} parent=1 // pred_fallthru
      _
    // Predicated region
    $region6: #{tpu_custom_call.1} parent=1 // pred_check
      _
    $region7: #{tpu_custom_call.1} parent=1 // pred_check_branch
      %24 = sbr.rel (0) target = $region9
    $region8: #{tpu_custom_call.1} parent=1 // pred_region
      %s26 = ssub.s32 512, 512
      %27 = vsyncadd [#allocation6], %s26
      %s28 = sshll.u32 [#allocation5], 4
      %s29 = int_to_ptr.vmem [resolvable:$true] %s28
      %34 = dma.hbm_to_vmem [thread:$0]  %s1, 512, %s29, [#allocation6], 128, 128, 8
    $region9: #{tpu_custom_call.1} parent=1 // pred_fallthru
      _
    // Predicated region
    $region10: #{tpu_custom_call.1} parent=1 // pred_check
      _
    $region11: #{tpu_custom_call.1} parent=1 // pred_check_branch
      %36 = sbr.rel (0) target = $region13
    $region12: #{tpu_custom_call.1} parent=1 // pred_region
      %s38 = ssub.s32 512, 512
      %39 = vsyncadd [#allocation6], %s38
      %s40 = sshll.u32 [#allocation7], 4
      %s41 = int_to_ptr.vmem [resolvable:$true] %s40
      %46 = dma.hbm_to_vmem [thread:$0]  %s2, 512, %s41, [#allocation6], 128, 128, 8
    $region13: #{tpu_custom_call.1} parent=1 // pred_fallthru
      _
    // Predicated region
    $region14: #{tpu_custom_call.1} parent=1 // pred_check
      _
    $region15: #{tpu_custom_call.1} parent=1 // pred_check_branch
      %48 = sbr.rel (0) target = $region17
    $region16: #{tpu_custom_call.1} parent=1 // pred_region
      %49 = dma.done [#allocation3], 256
    $region17: #{tpu_custom_call.1} parent=1 // pred_fallthru
      _
    // Predicated region
    $region18: #{tpu_custom_call.1} parent=1 // pred_check
      _
    $region19: #{tpu_custom_call.1} parent=1 // pred_check_branch
      %51 = sbr.rel (0) target = $region21
    $region20: #{tpu_custom_call.1} parent=1 // pred_region
      %52 = dma.done [#allocation6], 512
    $region21: #{tpu_custom_call.1} parent=1 // pred_fallthru
      _
    // Predicated region
    $region22: #{tpu_custom_call.1} parent=1 // pred_check
      _
    $region23: #{tpu_custom_call.1} parent=1 // pred_check_branch
      %54 = sbr.rel (0) target = $region25
    $region24: #{tpu_custom_call.1} parent=1 // pred_region
      %55 = dma.done [#allocation6], 512
    $region25: #{tpu_custom_call.1} parent=1 // pred_fallthru
      _
    %v56 = vld [vmem:[#allocation2] sm:$0xff]
    %v57 = vld [vmem:[#allocation2 + $0x8] sm:$0xff]
    %v58 = vmul.f32 %v56, -0.17677669
    %v59 = vmul.f32 %v57, -0.17677669
    %v60 = vld [vmem:[#allocation5] sm:$0xff]
    %v61 = vld [vmem:[#allocation5 + $0x8] sm:$0xff]
    %v62 = vld [vmem:[#allocation5 + $0x10] sm:$0xff]
    %v63 = vld [vmem:[#allocation5 + $0x18] sm:$0xff]
    %v64 = vld [vmem:[#allocation7] sm:$0xff]
    %v65 = vld [vmem:[#allocation7 + $0x8] sm:$0xff]
    %v66 = vld [vmem:[#allocation7 + $0x10] sm:$0xff]
    %v67 = vld [vmem:[#allocation7 + $0x18] sm:$0xff]
    %vm68 = vcmask 261120
    %v70 = vsel %vm68, %v58, 0
    %v73 = vsel %vm68, %v59, 0
    %v76 = vsel %vm68, %v60, 0
    %v79 = vsel %vm68, %v61, 0
    %v82 = vsel %vm68, %v62, 0
    %v85 = vsel %vm68, %v63, 0
    %87 = vmatprep.subr.mxu0 0.0
    %88 = vmatpush1.xpose.msra.mxu0 %v76
    %89 = vmatprep.subr.mxu0 0.0
    %90 = vmatpush1.xpose.msra.mxu0 %v79
    %91 = vmatprep.subr.mxu0 0.0
    %92 = vmatpush1.xpose.msra.mxu0 %v82
    %93 = vmatprep.subr.mxu0 0.0
    %94 = vmatpush1.xpose.msra.mxu0 %v85
    %95 = vmatprep.subr.mxu0 0.0
    %96 = vmatpush1.xpose.msra.mxu0 0.0
    %97 = vmatprep.subr.mxu0 0.0
    %98 = vmatpush1.xpose.msra.mxu0 0.0
    %99 = vmatprep.subr.mxu0 0.0
    %100 = vmatpush1.xpose.msra.mxu0 0.0
    %101 = vmatprep.subr.mxu0 0.0
    %102 = vmatpush1.xpose.msra.mxu0 0.0
    %103 = vmatprep.subr.mxu0 0.0
    %104 = vmatpush1.xpose.msra.mxu0 0.0
    %105 = vmatprep.subr.mxu0 0.0
    %106 = vmatpush1.xpose.msra.mxu0 0.0
    %107 = vmatprep.subr.mxu0 0.0
    %108 = vmatpush1.xpose.msra.mxu0 0.0
    %109 = vmatprep.subr.mxu0 0.0
    %110 = vmatpush1.xpose.msra.mxu0 0.0
    %111 = vmatprep.subr.mxu0 0.0
    %112 = vmatpush1.xpose.msra.mxu0 0.0
    %113 = vmatprep.subr.mxu0 0.0
    %114 = vmatpush1.xpose.msra.mxu0 0.0
    %115 = vmatprep.subr.mxu0 0.0
    %116 = vmatpush1.xpose.msra.mxu0 0.0
    %117 = vmatprep.subr.mxu0 0.0
    %118 = vmatpush1.xpose.msra.mxu0 0.0
    %119 = vmatprep.subr.mxu0 0.0
    %120 = vmatpush1.xpose.msra.mxu0 0.0
    %121 = vmatprep.subr.mxu0 0.0
    %122 = vmatpush1.xpose.msra.mxu0 0.0
    %123 = vmatprep.subr.mxu0 0.0
    %124 = vmatpush1.xpose.msra.mxu0 0.0
    %125 = vmatprep.subr.mxu0 0.0
    %126 = vmatpush1.xpose.msra.mxu0 0.0
    %127 = vmatprep.subr.mxu0 0.0
    %128 = vmatpush1.xpose.msra.mxu0 0.0
    %129 = vmatprep.subr.mxu0 0.0
    %130 = vmatpush1.xpose.msra.mxu0 0.0
    %131 = vmatprep.subr.mxu0 0.0
    %132 = vmatpush1.xpose.msra.mxu0 0.0
    %133 = vmatprep.subr.mxu0 0.0
    %134 = vmatpush1.xpose.msra.mxu0 0.0
    %135 = vmatprep.subr.mxu0 0.0
    %136 = vmatpush1.xpose.msra.mxu0 0.0
    %137 = vmatprep.subr.mxu0 0.0
    %138 = vmatpush1.xpose.msra.mxu0 0.0
    %139 = vmatprep.subr.mxu0 0.0
    %140 = vmatpush1.xpose.msra.mxu0 0.0
    %141 = vmatprep.subr.mxu0 0.0
    %142 = vmatpush1.xpose.msra.mxu0 0.0
    %143 = vmatprep.subr.mxu0 0.0
    %144 = vmatpush1.xpose.msra.mxu0 0.0
    %145 = vmatprep.subr.mxu0 0.0
    %146 = vmatpush1.xpose.msra.mxu0 0.0
    %147 = vmatprep.subr.mxu0 0.0
    %148 = vmatpush1.xpose.msra.mxu0 0.0
    %149 = vmatprep.subr.mxu0 0.0
    %150 = vmatpush1.xpose.msra.mxu0 0.0
    %151 = vmatprep.mubr.f32.mxu0 0.0
    %152 = vmatmul.mubr.f32.gmra.mrb[0].mxu0 %v70
    %v153 = vpop.f32.mrb[0].mxu0
    %v154 = vadd.f32 0.0, %v153
    %v155 = vpop.f32.mrb[0].mxu0
    %156 = vmatprep.mubr.f32.mxu0 0.0
    %157 = vmatmul.mubr.f32.gmra.mrb[0].mxu0 %v73
    %v158 = vpop.f32.mrb[0].mxu0
    %v159 = vadd.f32 0.0, %v158
    %v160 = vpop.f32.mrb[0].mxu0
    %161 = vdwg.mxu0
    %v162 = vsel %vm68, %v154, -inf
    %v163 = vrot.slane %v162, 4
    %v164 = vmax.f32 %v162, %v163
    %v165 = vrot.slane %v164, 2
    %v166 = vmax.f32 %v164, %v165
    %v167 = vrot.slane %v166, 1
    %v168 = vmax.f32 %v166, %v167
    %v169 = vsel %vm68, %v159, -inf
    %v170 = vrot.slane %v169, 4
    %v171 = vmax.f32 %v169, %v170
    %v172 = vrot.slane %v171, 2
    %v173 = vmax.f32 %v171, %v172
    %v174 = vrot.slane %v173, 1
    %v175 = vmax.f32 %v173, %v174
    %v176 = vsub.f32 %v154, %v168
    %v177 = vsub.f32 %v159, %v175
    %v178 = vmul.f32 %v176, 1.442695
    %v179 = vpow.pop %v178
    %v180 = vmul.f32 %v177, 1.442695
    %v181 = vpow.pop %v180
    %v182 = vsel %vm68, %v179, 0.0
    %v183 = vrot.slane %v182, 4
    %v184 = vadd.f32 %v182, %v183
    %v185 = vrot.slane %v184, 2
    %v186 = vadd.f32 %v184, %v185
    %v187 = vrot.slane %v186, 1
    %v188 = vadd.f32 %v186, %v187
    %v189 = vsel %vm68, %v181, 0.0
    %v190 = vrot.slane %v189, 4
    %v191 = vadd.f32 %v189, %v190
    %v192 = vrot.slane %v191, 2
    %v193 = vadd.f32 %v191, %v192
    %v194 = vrot.slane %v193, 1
    %v195 = vadd.f32 %v193, %v194
    %v196 = vrcp.pop %v188
    %v197 = vrcp.pop %v195
    %v198 = vmul.f32 %v179, %v196
    %v199 = vmul.f32 %v181, %v197
    %v200 = vmul.f32 %v198, 2.0
    %v201 = vmul.f32 %v199, 2.0
    %v202 = vsel %vm68, %v200, -inf
    %v203 = vrot.slane %v202, 4
    %v204 = vmax.f32 %v202, %v203
    %v205 = vrot.slane %v204, 2
    %v206 = vmax.f32 %v204, %v205
    %v207 = vrot.slane %v206, 1
    %v208 = vmax.f32 %v206, %v207
    %v209 = vsel %vm68, %v201, -inf
    %v210 = vrot.slane %v209, 4
    %v211 = vmax.f32 %v209, %v210
    %v212 = vrot.slane %v211, 2
    %v213 = vmax.f32 %v211, %v212
    %v214 = vrot.slane %v213, 1
    %v215 = vmax.f32 %v213, %v214
    %v216 = vsub.f32 %v200, %v208
    %v217 = vsub.f32 %v201, %v215
    %v218 = vmul.f32 %v216, 1.442695
    %v219 = vpow.pop %v218
    %v220 = vmul.f32 %v217, 1.442695
    %v221 = vpow.pop %v220
    %v222 = vsel %vm68, %v219, 0.0
    %v223 = vrot.slane %v222, 4
    %v224 = vadd.f32 %v222, %v223
    %v225 = vrot.slane %v224, 2
    %v226 = vadd.f32 %v224, %v225
    %v227 = vrot.slane %v226, 1
    %v228 = vadd.f32 %v226, %v227
    %v229 = vsel %vm68, %v221, 0.0
    %v230 = vrot.slane %v229, 4
    %v231 = vadd.f32 %v229, %v230
    %v232 = vrot.slane %v231, 2
    %v233 = vadd.f32 %v231, %v232
    %v234 = vrot.slane %v233, 1
    %v235 = vadd.f32 %v233, %v234
    %v236 = vrcp.pop %v228
    %v237 = vrcp.pop %v235
    %v238 = vmul.f32 %v219, %v236
    %v239 = vmul.f32 %v221, %v237
    %v240 = vsub.f32 1.0, %v238
    %v241 = vsub.f32 1.0, %v239
    %v242 = vmax.f32 %v240, 1e-30
    %v243 = vmax.f32 %v241, 1e-30
    %v244 = vlog2.pop %v242
    %v245 = vmul.f32 %v244, 0.6931472
    %v246 = vlog2.pop %v243
    %v247 = vmul.f32 %v246, 0.6931472
    %v248 = vadd.f32 %v198, %v245
    %v249 = vadd.f32 %v199, %v247
    %v250 = vmul.f32 %v248, 2.0
    %v251 = vmul.f32 %v249, 2.0
    %v252 = vsel %vm68, %v250, -inf
    %v253 = vrot.slane %v252, 4
    %v254 = vmax.f32 %v252, %v253
    %v255 = vrot.slane %v254, 2
    %v256 = vmax.f32 %v254, %v255
    %v257 = vrot.slane %v256, 1
    %v258 = vmax.f32 %v256, %v257
    %v259 = vsel %vm68, %v251, -inf
    %v260 = vrot.slane %v259, 4
    %v261 = vmax.f32 %v259, %v260
    %v262 = vrot.slane %v261, 2
    %v263 = vmax.f32 %v261, %v262
    %v264 = vrot.slane %v263, 1
    %v265 = vmax.f32 %v263, %v264
    %v266 = vsub.f32 %v250, %v258
    %v267 = vsub.f32 %v251, %v265
    %v268 = vmul.f32 %v266, 1.442695
    %v269 = vpow.pop %v268
    %v270 = vmul.f32 %v267, 1.442695
    %v271 = vpow.pop %v270
    %v272 = vsel %vm68, %v269, 0.0
    %v273 = vrot.slane %v272, 4
    %v274 = vadd.f32 %v272, %v273
    %v275 = vrot.slane %v274, 2
    %v276 = vadd.f32 %v274, %v275
    %v277 = vrot.slane %v276, 1
    %v278 = vadd.f32 %v276, %v277
    %v279 = vsel %vm68, %v271, 0.0
    %v280 = vrot.slane %v279, 4
    %v281 = vadd.f32 %v279, %v280
    %v282 = vrot.slane %v281, 2
    %v283 = vadd.f32 %v281, %v282
    %v284 = vrot.slane %v283, 1
    %v285 = vadd.f32 %v283, %v284
    %v286 = vrcp.pop %v278
    %v287 = vrcp.pop %v285
    %v288 = vmul.f32 %v269, %v286
    %v289 = vmul.f32 %v271, %v287
    %v290 = vsub.f32 1.0, %v288
    %v291 = vsub.f32 1.0, %v289
    %v292 = vmax.f32 %v290, 1e-30
    %v293 = vmax.f32 %v291, 1e-30
    %v294 = vlog2.pop %v292
    %v295 = vmul.f32 %v294, 0.6931472
    %v296 = vlog2.pop %v293
    %v297 = vmul.f32 %v296, 0.6931472
    %v298 = vadd.f32 %v248, %v295
    %v299 = vadd.f32 %v249, %v297
    %v300 = vmul.f32 %v298, 2.0
    %v301 = vmul.f32 %v299, 2.0
    %v302 = vsel %vm68, %v300, -inf
    %v303 = vrot.slane %v302, 4
    %v304 = vmax.f32 %v302, %v303
    %v305 = vrot.slane %v304, 2
    %v306 = vmax.f32 %v304, %v305
    %v307 = vrot.slane %v306, 1
    %v308 = vmax.f32 %v306, %v307
    %v309 = vsel %vm68, %v301, -inf
    %v310 = vrot.slane %v309, 4
    %v311 = vmax.f32 %v309, %v310
    %v312 = vrot.slane %v311, 2
    %v313 = vmax.f32 %v311, %v312
    %v314 = vrot.slane %v313, 1
    %v315 = vmax.f32 %v313, %v314
    %v316 = vsub.f32 %v300, %v308
    %v317 = vsub.f32 %v301, %v315
    %v318 = vmul.f32 %v316, 1.442695
    %v319 = vpow.pop %v318
    %v320 = vmul.f32 %v317, 1.442695
    %v321 = vpow.pop %v320
    %v322 = vsel %vm68, %v319, 0.0
    %v323 = vrot.slane %v322, 4
    %v324 = vadd.f32 %v322, %v323
    %v325 = vrot.slane %v324, 2
    %v326 = vadd.f32 %v324, %v325
    %v327 = vrot.slane %v326, 1
    %v328 = vadd.f32 %v326, %v327
    %v329 = vsel %vm68, %v321, 0.0
    %v330 = vrot.slane %v329, 4
    %v331 = vadd.f32 %v329, %v330
    %v332 = vrot.slane %v331, 2
    %v333 = vadd.f32 %v331, %v332
    %v334 = vrot.slane %v333, 1
    %v335 = vadd.f32 %v333, %v334
    %v336 = vrcp.pop %v328
    %v337 = vrcp.pop %v335
    %v338 = vmul.f32 %v319, %v336
    %v339 = vmul.f32 %v321, %v337
    %v340 = vsub.f32 1.0, %v338
    %v341 = vsub.f32 1.0, %v339
    %v342 = vmax.f32 %v340, 1e-30
    %v343 = vmax.f32 %v341, 1e-30
    %v344 = vlog2.pop %v342
    %v345 = vmul.f32 %v344, 0.6931472
    %v346 = vlog2.pop %v343
    %v347 = vmul.f32 %v346, 0.6931472
    %v348 = vadd.f32 %v298, %v345
    %v349 = vadd.f32 %v299, %v347
    %v350 = vmul.f32 %v348, 2.0
    %v351 = vmul.f32 %v349, 2.0
    %v352 = vsel %vm68, %v350, -inf
    %v353 = vrot.slane %v352, 4
    %v354 = vmax.f32 %v352, %v353
    %v355 = vrot.slane %v354, 2
    %v356 = vmax.f32 %v354, %v355
    %v357 = vrot.slane %v356, 1
    %v358 = vmax.f32 %v356, %v357
    %v359 = vsel %vm68, %v351, -inf
    %v360 = vrot.slane %v359, 4
    %v361 = vmax.f32 %v359, %v360
    %v362 = vrot.slane %v361, 2
    %v363 = vmax.f32 %v361, %v362
    %v364 = vrot.slane %v363, 1
    %v365 = vmax.f32 %v363, %v364
    %v366 = vsub.f32 %v350, %v358
    %v367 = vsub.f32 %v351, %v365
    %v368 = vmul.f32 %v366, 1.442695
    %v369 = vpow.pop %v368
    %v370 = vmul.f32 %v367, 1.442695
    %v371 = vpow.pop %v370
    %v372 = vsel %vm68, %v369, 0.0
    %v373 = vrot.slane %v372, 4
    %v374 = vadd.f32 %v372, %v373
    %v375 = vrot.slane %v374, 2
    %v376 = vadd.f32 %v374, %v375
    %v377 = vrot.slane %v376, 1
    %v378 = vadd.f32 %v376, %v377
    %v379 = vsel %vm68, %v371, 0.0
    %v380 = vrot.slane %v379, 4
    %v381 = vadd.f32 %v379, %v380
    %v382 = vrot.slane %v381, 2
    %v383 = vadd.f32 %v381, %v382
    %v384 = vrot.slane %v383, 1
    %v385 = vadd.f32 %v383, %v384
    %v386 = vrcp.pop %v378
    %v387 = vrcp.pop %v385
    %v388 = vmul.f32 %v369, %v386
    %v389 = vmul.f32 %v371, %v387
    %v391 = vsel %vm68, %v238, 0
    %v394 = vsel %vm68, %v239, 0
    %v397 = vsel %vm68, %v288, 0
    %v400 = vsel %vm68, %v289, 0
    %v403 = vsel %vm68, %v338, 0
    %v406 = vsel %vm68, %v339, 0
    %v409 = vsel %vm68, %v388, 0
    %v412 = vsel %vm68, %v389, 0
    %414 = vmatprep.subr.mxu0 0.0
    %415 = vmatpush1.msra.mxu0 %v64
    %416 = vmatprep.subr.mxu0 0.0
    %417 = vmatpush1.msra.mxu0 %v65
    %418 = vmatprep.subr.mxu0 0.0
    %419 = vmatpush1.msra.mxu0 %v66
    %420 = vmatprep.subr.mxu0 0.0
    %421 = vmatpush1.msra.mxu0 %v67
    %422 = vmatprep.subr.mxu0 0.0
    %423 = vmatpush1.msra.mxu0 0.0
    %424 = vmatprep.subr.mxu0 0.0
    %425 = vmatpush1.msra.mxu0 0.0
    %426 = vmatprep.subr.mxu0 0.0
    %427 = vmatpush1.msra.mxu0 0.0
    %428 = vmatprep.subr.mxu0 0.0
    %429 = vmatpush1.msra.mxu0 0.0
    %430 = vmatprep.subr.mxu0 0.0
    %431 = vmatpush1.msra.mxu0 0.0
    %432 = vmatprep.subr.mxu0 0.0
    %433 = vmatpush1.msra.mxu0 0.0
    %434 = vmatprep.subr.mxu0 0.0
    %435 = vmatpush1.msra.mxu0 0.0
    %436 = vmatprep.subr.mxu0 0.0
    %437 = vmatpush1.msra.mxu0 0.0
    %438 = vmatprep.subr.mxu0 0.0
    %439 = vmatpush1.msra.mxu0 0.0
    %440 = vmatprep.subr.mxu0 0.0
    %441 = vmatpush1.msra.mxu0 0.0
    %442 = vmatprep.subr.mxu0 0.0
    %443 = vmatpush1.msra.mxu0 0.0
    %444 = vmatprep.subr.mxu0 0.0
    %445 = vmatpush1.msra.mxu0 0.0
    %446 = vmatprep.subr.mxu0 0.0
    %447 = vmatpush1.msra.mxu0 0.0
    %448 = vmatprep.subr.mxu0 0.0
    %449 = vmatpush1.msra.mxu0 0.0
    %450 = vmatprep.subr.mxu0 0.0
    %451 = vmatpush1.msra.mxu0 0.0
    %452 = vmatprep.subr.mxu0 0.0
    %453 = vmatpush1.msra.mxu0 0.0
    %454 = vmatprep.subr.mxu0 0.0
    %455 = vmatpush1.msra.mxu0 0.0
    %456 = vmatprep.subr.mxu0 0.0
    %457 = vmatpush1.msra.mxu0 0.0
    %458 = vmatprep.subr.mxu0 0.0
    %459 = vmatpush1.msra.mxu0 0.0
    %460 = vmatprep.subr.mxu0 0.0
    %461 = vmatpush1.msra.mxu0 0.0
    %462 = vmatprep.subr.mxu0 0.0
    %463 = vmatpush1.msra.mxu0 0.0
    %464 = vmatprep.subr.mxu0 0.0
    %465 = vmatpush1.msra.mxu0 0.0
    %466 = vmatprep.subr.mxu0 0.0
    %467 = vmatpush1.msra.mxu0 0.0
    %468 = vmatprep.subr.mxu0 0.0
    %469 = vmatpush1.msra.mxu0 0.0
    %470 = vmatprep.subr.mxu0 0.0
    %471 = vmatpush1.msra.mxu0 0.0
    %472 = vmatprep.subr.mxu0 0.0
    %473 = vmatpush1.msra.mxu0 0.0
    %474 = vmatprep.subr.mxu0 0.0
    %475 = vmatpush1.msra.mxu0 0.0
    %476 = vmatprep.subr.mxu0 0.0
    %477 = vmatpush1.msra.mxu0 0.0
    %478 = vmatprep.mubr.f32.mxu0 0.0
    %479 = vmatmul.mubr.f32.gmra.mrb[0].mxu0 %v391
    %v480 = vpop.f32.mrb[0].mxu0
    %v481 = vadd.f32 0.0, %v480
    %v482 = vpop.f32.mrb[0].mxu0
    %483 = vmatprep.mubr.f32.mxu0 0.0
    %484 = vmatmul.mubr.f32.gmra.mrb[0].mxu0 %v394
    %v485 = vpop.f32.mrb[0].mxu0
    %v486 = vadd.f32 0.0, %v485
    %v487 = vpop.f32.mrb[0].mxu0
    %488 = vmatprep.mubr.f32.mxu0 0.0
    %489 = vmatmul.mubr.f32.gmra.mrb[0].mxu0 %v397
    %v490 = vpop.f32.mrb[0].mxu0
    %v491 = vadd.f32 0.0, %v490
    %v492 = vpop.f32.mrb[0].mxu0
    %493 = vmatprep.mubr.f32.mxu0 0.0
    %494 = vmatmul.mubr.f32.gmra.mrb[0].mxu0 %v400
    %v495 = vpop.f32.mrb[0].mxu0
    %v496 = vadd.f32 0.0, %v495
    %v497 = vpop.f32.mrb[0].mxu0
    %498 = vmatprep.mubr.f32.mxu0 0.0
    %499 = vmatmul.mubr.f32.gmra.mrb[0].mxu0 %v403
    %v500 = vpop.f32.mrb[0].mxu0
    %v501 = vadd.f32 0.0, %v500
    %v502 = vpop.f32.mrb[0].mxu0
    %503 = vmatprep.mubr.f32.mxu0 0.0
    %504 = vmatmul.mubr.f32.gmra.mrb[0].mxu0 %v406
    %v505 = vpop.f32.mrb[0].mxu0
    %v506 = vadd.f32 0.0, %v505
    %v507 = vpop.f32.mrb[0].mxu0
    %508 = vmatprep.mubr.f32.mxu0 0.0
    %509 = vmatmul.mubr.f32.gmra.mrb[0].mxu0 %v409
    %v510 = vpop.f32.mrb[0].mxu0
    %v511 = vadd.f32 0.0, %v510
    %v512 = vpop.f32.mrb[0].mxu0
    %513 = vmatprep.mubr.f32.mxu0 0.0
    %514 = vmatmul.mubr.f32.gmra.mrb[0].mxu0 %v412
    %v515 = vpop.f32.mrb[0].mxu0
    %v516 = vadd.f32 0.0, %v515
    %v517 = vpop.f32.mrb[0].mxu0
    %518 = vdwg.mxu0
    %519 = vst.msk [vmem:[#allocation8] sm:$0xff] %vm68, %v481
    %520 = vst.msk [vmem:[#allocation8 + $0x8] sm:$0xff] %vm68, %v486
    %523 = vrot.lane.b32.xlu0 %v491, 32
    %v524 = vpop.permute.xlu0 %523
    %525 = vrot.lane.b32.xlu0 %v496, 32
    %v526 = vpop.permute.xlu0 %525
    %vm529 = vcmask 523520
    %530 = vst.msk [vmem:[#allocation8] sm:$0xff] %vm529, %v524
    %531 = vst.msk [vmem:[#allocation8 + $0x8] sm:$0xff] %vm529, %v526
    %534 = vrot.lane.b32.xlu0 %v501, 64
    %v535 = vpop.permute.xlu0 %534
    %536 = vrot.lane.b32.xlu0 %v506, 64
    %v537 = vpop.permute.xlu0 %536
    %vm540 = vcmask 785920
    %541 = vst.msk [vmem:[#allocation8] sm:$0xff] %vm540, %v535
    %542 = vst.msk [vmem:[#allocation8 + $0x8] sm:$0xff] %vm540, %v537
    %545 = vrot.lane.b32.xlu0 %v511, 96
    %v546 = vpop.permute.xlu0 %545
    %547 = vrot.lane.b32.xlu0 %v516, 96
    %v548 = vpop.permute.xlu0 %547
    %vm551 = vcmask 1048320
    %552 = vst.msk [vmem:[#allocation8] sm:$0xff] %vm551, %v546
    %553 = vst.msk [vmem:[#allocation8 + $0x8] sm:$0xff] %vm551, %v548
    // Predicated region
    $region26: #{tpu_custom_call.1} parent=1 // pred_check
      _
    $region27: #{tpu_custom_call.1} parent=1 // pred_check_branch
      %555 = sbr.rel (0) target = $region29
    $region28: #{tpu_custom_call.1} parent=1 // pred_region
      %s557 = ssub.s32 256, 256
      %558 = vsyncadd [#allocation4], %s557
      %s559 = sshll.u32 [#allocation8], 4
      %s560 = int_to_ptr.vmem [resolvable:$true] %s559
      %565 = dma.vmem_to_hbm [thread:$0]  %s560, 256, %s3, [#allocation4], 128, 128, 8
    $region29: #{tpu_custom_call.1} parent=1 // pred_fallthru
      _
    // Predicated region
    $region30: #{tpu_custom_call.1} parent=1 // pred_check
      _
    $region31: #{tpu_custom_call.1} parent=1 // pred_check_branch
      %567 = sbr.rel (0) target = $region33
    $region32: #{tpu_custom_call.1} parent=1 // pred_region
      %568 = dma.done [#allocation4], 256
    $region33: #{tpu_custom_call.1} parent=1 // pred_fallthru
      _
    %569 = vsyncpa [#allocation3], 1
    %570 = vsyncpa [#allocation6], 1
    %571 = vsyncpa [#allocation4], 1

</llo_original>
